<compile_context>
chip_gen: v6e
topology: v6e:2x2x1
jax: 0.10.0
libtpu: 0.0.40
codegen_flags: <defaults>
</compile_context>

<pallas_src>
import jax
import jax.numpy as jnp
from jax.experimental import pallas as pl
from jax.experimental.pallas import tpu as pltpu

WEIGHT = {'Score_map': 1.0, 'Angle': 1.0, 'Scale': 1.0, 'Translation': 1.0}
SCORE_WEIGHT = {'Positive_loss': 20.0, 'Negative_mask_loss': 10.0,
                'Negative_back_loss': 1.0}

_EPS = 1e-6
# Conservative budget for the double-buffered inputs of one grid step; leaves
# ample headroom (intermediates, output, slack) under v5e's 16 MiB scoped-VMEM
# default — and trivially under v6e/v7x defaults.
_VMEM_BUDGET_BYTES = 4 * 1024 * 1024


def _focal(c):
    # -0.25 * (1 - c)^2 * log(c)   (c already clipped to [eps, 1-eps])
    return -0.25 * (1.0 - c) * (1.0 - c) * jnp.log(c)


def _smooth_l1(d):
    ad = jnp.abs(d)
    return jnp.where(ad < 1.0, 0.5 * d * d, ad - 0.5)


def _matching_loss_kernel(slab_ref,   # (TB, 7, HW): conf_in, gt_score, 5 residuals
                          dust_ref,   # (TB, 6, DPAD): conf_col, conf_row, 4 masks
                          out_ref):   # (1, 1, 128): 6 partial sums in lanes 0..5
    slab = slab_ref[...]
    dust = dust_ref[...]

    # ---- positive (matched) cells: focal negative-log term ----
    conf_in = jnp.clip(slab[:, 0:1], _EPS, 1.0 - _EPS)       # (TB, 1, HW)
    gts = slab[:, 1:2]                                       # (TB, 1, HW)
    pos = (gts == 1.0).astype(jnp.float32)
    sel = (gts != 0.0).astype(jnp.float32)

    pos_s = jnp.sum(pos * _focal(conf_in))

    # ---- regression (SmoothL1 of pre-computed residuals), masked by sel ----
    reg = sel * _smooth_l1(slab[:, 2:7])                     # (TB, 5, HW)
    ang_s = jnp.sum(reg[:, 0:2])
    scl_s = jnp.sum(reg[:, 2:3])
    trn_s = jnp.sum(reg[:, 3:5])

    # ---- dustbin negatives: focal once, reused for in-mask / background ----
    f2 = _focal(jnp.clip(dust[:, 0:2], _EPS, 1.0 - _EPS))    # (TB, 2, DPAD)
    negm_s = jnp.sum(dust[:, 2:4] * f2)
    negb_s = jnp.sum(dust[:, 4:6] * f2)

    # ---- single unmasked lane-dense store of the 6 partial sums ----
    lane = jax.lax.broadcasted_iota(jnp.int32, (1, 128), 1)
    row = (jnp.where(lane == 0, pos_s, 0.0)
           + jnp.where(lane == 1, negm_s, 0.0)
           + jnp.where(lane == 2, negb_s, 0.0)
           + jnp.where(lane == 3, ang_s, 0.0)
           + jnp.where(lane == 4, scl_s, 0.0)
           + jnp.where(lane == 5, trn_s, 0.0))
    out_ref[0] = row


def matching_loss(score_map, angle_map, scale_map, trans_map, data_dict):
    """score_map (B,H+1,W+1); angle_map (B,H,W,2); scale_map (B,H,W,1);
    trans_map (B,H,W,2); data_dict holds GT tensors (see __main__)."""
    mm = data_dict['Matching_map'].astype(jnp.float32)               # (B,3,H,W)
    gt_score = mm[:, 0]                                              # (B,H,W)
    B, H, W = gt_score.shape
    HW = H * W
    DPAD = max(128, -(-H // 128) * 128, -(-W // 128) * 128)

    conf = score_map.astype(jnp.float32)                             # (B,H+1,W+1)
    conf_in = conf[:, :H, :W].reshape(B, 1, HW)
    conf_col = conf[:, :H, W]                                        # (B,H)
    conf_row = conf[:, H, :W]                                        # (B,W)

    # ---- GT scalars folded into regression residuals (no SMEM table, no
    #      broadcast GT maps, no separate GT-translation slab). ----
    rot = data_dict['Transformation_Rotation_Angle'].astype(jnp.float32)   # (B,1)
    scl = data_dict['Transformation_Scale'].astype(jnp.float32)            # (B,1)
    cosv = jnp.cos(rot)[:, :, None]
    sinv = jnp.sin(rot)[:, :, None]
    lscl = jnp.log(scl)[:, :, None]

    am = angle_map.astype(jnp.float32)
    sm = scale_map.astype(jnp.float32)
    tm = trans_map.astype(jnp.float32)
    d_cos = (am[..., 0] - cosv).reshape(B, 1, HW)
    d_sin = (am[..., 1] - sinv).reshape(B, 1, HW)
    d_scl = (sm[..., 0] - lscl).reshape(B, 1, HW)
    d_t0 = (tm[..., 0] - mm[:, 1]).reshape(B, 1, HW)
    d_t1 = (tm[..., 1] - mm[:, 2]).reshape(B, 1, HW)

    slab = jnp.concatenate(
        [conf_in, gt_score.reshape(B, 1, HW), d_cos, d_sin, d_scl, d_t0, d_t1],
        axis=1)                                                      # (B,7,HW)

    # ---- dustbin pack: masks precomputed on host, lane-padded to DPAD ----
    mi = data_dict['Template_square_mask'].reshape(B, H).astype(jnp.float32) > 0.5
    mt = data_dict['Target_square_mask'].reshape(B, W).astype(jnp.float32) > 0.5
    rz = jnp.sum(gt_score, axis=2) == 0.0                            # (B,H)
    cz = jnp.sum(gt_score, axis=1) == 0.0                            # (B,W)
    negm_col = jnp.logical_and(rz, mi).astype(jnp.float32)
    negm_row = jnp.logical_and(cz, mt).astype(jnp.float32)
    negb_col = jnp.logical_not(mi).astype(jnp.float32)
    negb_row = jnp.logical_not(mt).astype(jnp.float32)

    def _lanepad(x):
        return jnp.pad(x, ((0, 0), (0, DPAD - x.shape[-1])))

    dust = jnp.stack([_lanepad(conf_col), _lanepad(conf_row),
                      _lanepad(negm_col), _lanepad(negm_row),
                      _lanepad(negb_col), _lanepad(negb_row)], axis=1)  # (B,6,DPAD)

    # ---- GT-only counts stay in the wrapper (cheap XLA ops on GT data) ----
    pos_cnt = jnp.sum((gt_score == 1.0).astype(jnp.float32))
    sel_cnt = jnp.sum((gt_score != 0.0).astype(jnp.float32))
    negm_cnt = jnp.sum(negm_col) + jnp.sum(negm_row)
    negb_cnt = jnp.sum(negb_col) + jnp.sum(negb_row)

    # ---- batch blocking: TB items per grid step, grid >= 2 when B >= 2 ----
    per_item_bytes = 4 * (7 * HW + 6 * DPAD)
    tb_cap = max(1, _VMEM_BUDGET_BYTES // (2 * per_item_bytes))      # 2x double-buffer
    TB = max(1, min(tb_cap, pl.cdiv(B, 2)))
    G = pl.cdiv(B, TB)
    Bp = G * TB
    if Bp != B:
        # Zero padding contributes exactly 0 to every sum (all masks are zero).
        slab = jnp.pad(slab, ((0, Bp - B), (0, 0), (0, 0)))
        dust = jnp.pad(dust, ((0, Bp - B), (0, 0), (0, 0)))

    cost = pl.CostEstimate(
        flops=8 * Bp * (7 * HW + 6 * DPAD),
        transcendentals=Bp * (HW + 2 * DPAD),
        bytes_accessed=4 * (Bp * (7 * HW + 6 * DPAD) + G * 128))

    partials = pl.pallas_call(
        _matching_loss_kernel,
        out_shape=jax.ShapeDtypeStruct((G, 1, 128), jnp.float32),
        grid=(G,),
        in_specs=[
            pl.BlockSpec((TB, 7, HW), lambda g: (g, 0, 0)),
            pl.BlockSpec((TB, 6, DPAD), lambda g: (g, 0, 0)),
        ],
        out_specs=pl.BlockSpec((1, 1, 128), lambda g: (g, 0, 0)),
        compiler_params=pltpu.CompilerParams(
            dimension_semantics=("parallel",)),
        cost_estimate=cost,
    )(slab, dust)

    stats = jnp.sum(partials[:, 0, :], axis=0)                       # (128,)

    pos_mean = stats[0] / pos_cnt
    negm_mean = stats[1] / negm_cnt
    negb_mean = stats[2] / negb_cnt
    # NOTE: like the PyTorch module, the regression means become NaN when there
    # are no matched cells; only the score terms get the isnan-skip below.
    loss_angle = stats[3] / (sel_cnt * 2.0)
    loss_scale = stats[4] / (sel_cnt * 1.0)
    loss_trans = stats[5] / (sel_cnt * 2.0)

    def _safe(x):  # mirrors the `isnan()` skip in the PyTorch forward
        return jnp.where(jnp.isnan(x), 0.0, x)

    loss_score = (SCORE_WEIGHT['Positive_loss'] * _safe(pos_mean)
                  + SCORE_WEIGHT['Negative_mask_loss'] * _safe(negm_mean)
                  + SCORE_WEIGHT['Negative_back_loss'] * _safe(negb_mean))

    loss = (loss_score * WEIGHT['Score_map']
            + loss_angle * WEIGHT['Angle']
            + loss_scale * WEIGHT['Scale']
            + loss_trans * WEIGHT['Translation'])

    loss_dict = {'Positive_loss': pos_mean, 'Negative_mask_loss': negm_mean,
                 'Negative_back_loss': negb_mean, 'Angle': loss_angle,
                 'Scale': loss_scale, 'Translation': loss_trans}
    return loss, loss_dict


def _reference_loss(score_map, angle_map, scale_map, trans_map, data_dict):
    """Pure-jnp mirror of the PyTorch forward (masked-sum form)."""
    eps = 1e-6
    gts = data_dict['Matching_map'][:, 0].astype(jnp.float32)
    gt_trans = jnp.transpose(data_dict['Matching_map'][:, 1:], (0, 2, 3, 1))
    B, H, W = gts.shape
    conf = jnp.clip(score_map.astype(jnp.float32), eps, 1 - eps)
    cin, ccol, crow = conf[:, :H, :W], conf[:, :H, W], conf[:, H, :W]
    foc = lambda c: -0.25 * (1 - c) ** 2 * jnp.log(c)
    pos = gts == 1
    pos_mean = jnp.sum(jnp.where(pos, foc(cin), 0)) / jnp.sum(pos)
    mi = data_dict['Template_square_mask'].reshape(B, -1) > 0.5
    mt = data_dict['Target_square_mask'].reshape(B, -1) > 0.5
    rz, cz = gts.sum(-1) == 0, gts.sum(1) == 0
    n0m, n1m = rz & mi, cz & mt
    negm = (jnp.sum(jnp.where(n0m, foc(ccol), 0)) + jnp.sum(jnp.where(n1m, foc(crow), 0))) \
        / (jnp.sum(n0m) + jnp.sum(n1m))
    n0b, n1b = ~mi, ~mt
    negb = (jnp.sum(jnp.where(n0b, foc(ccol), 0)) + jnp.sum(jnp.where(n1b, foc(crow), 0))) \
        / (jnp.sum(n0b) + jnp.sum(n1b))
    rot = data_dict['Transformation_Rotation_Angle']
    scl = data_dict['Transformation_Scale']
    gcs = jnp.concatenate([jnp.cos(rot), jnp.sin(rot), jnp.log(scl)], -1)
    gcs = jnp.broadcast_to(gcs[:, None, None, :], (B, H, W, 3))
    sl1 = lambda p, t: jnp.where(jnp.abs(p - t) < 1, 0.5 * (p - t) ** 2, jnp.abs(p - t) - 0.5)
    sel = (gts != 0)[..., None]
    cnt = jnp.sum(gts != 0)
    la = jnp.sum(jnp.where(sel, sl1(angle_map, gcs[..., :2]), 0)) / (cnt * 2)
    ls = jnp.sum(jnp.where(sel, sl1(scale_map, gcs[..., 2:]), 0)) / cnt
    lt = jnp.sum(jnp.where(sel, sl1(trans_map, gt_trans), 0)) / (cnt * 2)
    return 20 * pos_mean + 10 * negm + 1 * negb + la + ls + lt


if __name__ == "__main__":
    key = jax.random.PRNGKey(0)
    B, H, W = 2, 16, 16
    ks = jax.random.split(key, 8)

    score_map = jax.nn.sigmoid(jax.random.normal(ks[0], (B, H + 1, W + 1), jnp.float32))
    angle_map = 0.5 * jax.random.normal(ks[1], (B, H, W, 2), jnp.float32)
    scale_map = 0.5 * jax.random.normal(ks[2], (B, H, W, 1), jnp.float32)
    trans_map = 0.5 * jax.random.normal(ks[3], (B, H, W, 2), jnp.float32)

    # GT assignment: first 8 template points matched to target points 0..7.
    idx = jnp.arange(8)
    gt_score = jnp.zeros((B, H, W), jnp.float32).at[:, idx, idx].set(1.0)
    gt_trans = 0.5 * jax.random.normal(ks[4], (B, 2, H, W), jnp.float32)
    matching_map = jnp.concatenate([gt_score[:, None], gt_trans], axis=1)  # (B,3,H,W)

    rot = jax.random.uniform(ks[5], (B, 1), minval=-1.0, maxval=1.0)
    scl = jax.random.uniform(ks[6], (B, 1), minval=0.5, maxval=2.0)

    mask_init = jnp.concatenate([jnp.ones((B, 12)), jnp.zeros((B, 4))], axis=1)
    mask_term = jnp.concatenate([jnp.ones((B, 12)), jnp.zeros((B, 4))], axis=1)

    data_dict = {
        'Matching_map': matching_map,
        'Transformation_Rotation_Angle': rot,
        'Transformation_Scale': scl,
        'Template_square_mask': mask_init,
        'Target_square_mask': mask_term,
    }

    loss, loss_dict = jax.jit(matching_loss)(score_map, angle_map, scale_map,
                                             trans_map, data_dict)
    loss = jax.block_until_ready(loss)

    ref = jax.block_until_ready(
        _reference_loss(score_map, angle_map, scale_map, trans_map, data_dict))
    assert jnp.isfinite(loss), "loss is not finite"
    assert abs(float(loss) - float(ref)) < 1e-3, (float(loss), float(ref))

    print("KERNEL_OK")
</pallas_src>

<mosaic_0001>
module attributes {stable_mosaic.version = 11 : i64} {
  func.func @_matching_loss_kernel(%arg0: i32, %arg1: memref<1x7x256xf32, #tpu.memory_space<vmem>>, %arg2: memref<1x6x128xf32, #tpu.memory_space<vmem>>, %arg3: memref<1x1x128xf32, #tpu.memory_space<vmem>>) attributes {dimension_semantics = [#tpu.dimension_semantics<parallel>], iteration_bounds = array<i64: 2>, scalar_prefetch = 0 : i64, scratch_operands = 0 : i64, tpu.core_type = #tpu.core_type<tc>, window_params = [{transform_indices = @transform_0, window_bounds = array<i64: 1, 7, 256>}, {transform_indices = @transform_1, window_bounds = array<i64: 1, 6, 128>}, {transform_indices = @transform_2, window_bounds = array<i64: 1, 1, 128>}]} {
    %c0 = arith.constant 0 : index
    %c0_0 = arith.constant 0 : index
    %c0_1 = arith.constant 0 : index
    %0 = vector.load %arg1[%c0, %c0_0, %c0_1] : memref<1x7x256xf32, #tpu.memory_space<vmem>>, vector<1x7x256xf32>
    %c0_2 = arith.constant 0 : index
    %c0_3 = arith.constant 0 : index
    %c0_4 = arith.constant 0 : index
    %1 = vector.load %arg2[%c0_2, %c0_3, %c0_4] : memref<1x6x128xf32, #tpu.memory_space<vmem>>, vector<1x6x128xf32>
    %2 = vector.extract_strided_slice %0 {offsets = [0, 0, 0], sizes = [1, 1, 256], strides = [1, 1, 1]} : vector<1x7x256xf32> to vector<1x1x256xf32>
    %cst = arith.constant 9.99999997E-7 : f32
    %cst_5 = arith.constant 0.999998986 : f32
    %3 = vector.broadcast %cst : f32 to vector<1x1x256xf32>
    %4 = arith.maximumf %3, %2 : vector<1x1x256xf32>
    %5 = vector.broadcast %cst_5 : f32 to vector<1x1x256xf32>
    %6 = arith.minimumf %5, %4 : vector<1x1x256xf32>
    %7 = vector.extract_strided_slice %0 {offsets = [0, 1, 0], sizes = [1, 1, 256], strides = [1, 1, 1]} : vector<1x7x256xf32> to vector<1x1x256xf32>
    %cst_6 = arith.constant 1.000000e+00 : f32
    %8 = vector.broadcast %cst_6 : f32 to vector<1x1x256xf32>
    %9 = arith.cmpf oeq, %7, %8 : vector<1x1x256xf32>
    %10 = arith.extui %9 : vector<1x1x256xi1> to vector<1x1x256xi32>
    %11 = arith.sitofp %10 : vector<1x1x256xi32> to vector<1x1x256xf32>
    %cst_7 = arith.constant 0.000000e+00 : f32
    %12 = vector.broadcast %cst_7 : f32 to vector<1x1x256xf32>
    %13 = arith.cmpf one, %7, %12 : vector<1x1x256xf32>
    %14 = arith.extui %13 : vector<1x1x256xi1> to vector<1x1x256xi32>
    %15 = arith.sitofp %14 : vector<1x1x256xi32> to vector<1x1x256xf32>
    %cst_8 = arith.constant 1.000000e+00 : f32
    %16 = vector.broadcast %cst_8 : f32 to vector<1x1x256xf32>
    %17 = arith.subf %16, %6 : vector<1x1x256xf32>
    %cst_9 = arith.constant -2.500000e-01 : f32
    %18 = vector.broadcast %cst_9 : f32 to vector<1x1x256xf32>
    %19 = arith.mulf %18, %17 : vector<1x1x256xf32>
    %cst_10 = arith.constant 1.000000e+00 : f32
    %20 = vector.broadcast %cst_10 : f32 to vector<1x1x256xf32>
    %21 = arith.subf %20, %6 : vector<1x1x256xf32>
    %22 = arith.mulf %19, %21 : vector<1x1x256xf32>
    %23 = math.log %6 : vector<1x1x256xf32>
    %24 = arith.mulf %22, %23 : vector<1x1x256xf32>
    %25 = arith.mulf %11, %24 : vector<1x1x256xf32>
    %26 = vector.shape_cast %25 : vector<1x1x256xf32> to vector<1x1x1x256xf32>
    %cst_11 = arith.constant dense<0.000000e+00> : vector<1xf32>
    %27 = vector.multi_reduction <add>, %26, %cst_11 [1, 2, 3] : vector<1x1x1x256xf32> to vector<1xf32>
    %28 = vector.shape_cast %27 : vector<1xf32> to vector<1x1x1x1xf32>
    %29 = vector.extract %28[0, 0, 0, 0] : f32 from vector<1x1x1x1xf32>
    %30 = vector.extract_strided_slice %0 {offsets = [0, 2, 0], sizes = [1, 5, 256], strides = [1, 1, 1]} : vector<1x7x256xf32> to vector<1x5x256xf32>
    %31 = math.absf %30 : vector<1x5x256xf32>
    %cst_12 = arith.constant 1.000000e+00 : f32
    %32 = vector.broadcast %cst_12 : f32 to vector<1x5x256xf32>
    %33 = arith.cmpf olt, %31, %32 : vector<1x5x256xf32>
    %cst_13 = arith.constant 5.000000e-01 : f32
    %34 = vector.broadcast %cst_13 : f32 to vector<1x5x256xf32>
    %35 = arith.mulf %34, %30 : vector<1x5x256xf32>
    %36 = arith.mulf %35, %30 : vector<1x5x256xf32>
    %cst_14 = arith.constant 5.000000e-01 : f32
    %37 = vector.broadcast %cst_14 : f32 to vector<1x5x256xf32>
    %38 = arith.subf %31, %37 : vector<1x5x256xf32>
    %39 = arith.select %33, %36, %38 : vector<1x5x256xi1>, vector<1x5x256xf32>
    %40 = vector.broadcast %15 : vector<1x1x256xf32> to vector<1x5x256xf32>
    %41 = arith.mulf %40, %39 : vector<1x5x256xf32>
    %42 = vector.extract_strided_slice %41 {offsets = [0, 0, 0], sizes = [1, 2, 256], strides = [1, 1, 1]} : vector<1x5x256xf32> to vector<1x2x256xf32>
    %43 = vector.shape_cast %42 : vector<1x2x256xf32> to vector<1x1x2x256xf32>
    %cst_15 = arith.constant dense<0.000000e+00> : vector<1xf32>
    %44 = vector.multi_reduction <add>, %43, %cst_15 [1, 2, 3] : vector<1x1x2x256xf32> to vector<1xf32>
    %45 = vector.shape_cast %44 : vector<1xf32> to vector<1x1x1x1xf32>
    %46 = vector.extract %45[0, 0, 0, 0] : f32 from vector<1x1x1x1xf32>
    %47 = vector.extract_strided_slice %41 {offsets = [0, 2, 0], sizes = [1, 1, 256], strides = [1, 1, 1]} : vector<1x5x256xf32> to vector<1x1x256xf32>
    %48 = vector.shape_cast %47 : vector<1x1x256xf32> to vector<1x1x1x256xf32>
    %cst_16 = arith.constant dense<0.000000e+00> : vector<1xf32>
    %49 = vector.multi_reduction <add>, %48, %cst_16 [1, 2, 3] : vector<1x1x1x256xf32> to vector<1xf32>
    %50 = vector.shape_cast %49 : vector<1xf32> to vector<1x1x1x1xf32>
    %51 = vector.extract %50[0, 0, 0, 0] : f32 from vector<1x1x1x1xf32>
    %52 = vector.extract_strided_slice %41 {offsets = [0, 3, 0], sizes = [1, 2, 256], strides = [1, 1, 1]} : vector<1x5x256xf32> to vector<1x2x256xf32>
    %53 = vector.shape_cast %52 : vector<1x2x256xf32> to vector<1x1x2x256xf32>
    %cst_17 = arith.constant dense<0.000000e+00> : vector<1xf32>
    %54 = vector.multi_reduction <add>, %53, %cst_17 [1, 2, 3] : vector<1x1x2x256xf32> to vector<1xf32>
    %55 = vector.shape_cast %54 : vector<1xf32> to vector<1x1x1x1xf32>
    %56 = vector.extract %55[0, 0, 0, 0] : f32 from vector<1x1x1x1xf32>
    %57 = vector.extract_strided_slice %1 {offsets = [0, 0, 0], sizes = [1, 2, 128], strides = [1, 1, 1]} : vector<1x6x128xf32> to vector<1x2x128xf32>
    %cst_18 = arith.constant 9.99999997E-7 : f32
    %cst_19 = arith.constant 0.999998986 : f32
    %58 = vector.broadcast %cst_18 : f32 to vector<1x2x128xf32>
    %59 = arith.maximumf %58, %57 : vector<1x2x128xf32>
    %60 = vector.broadcast %cst_19 : f32 to vector<1x2x128xf32>
    %61 = arith.minimumf %60, %59 : vector<1x2x128xf32>
    %cst_20 = arith.constant 1.000000e+00 : f32
    %62 = vector.broadcast %cst_20 : f32 to vector<1x2x128xf32>
    %63 = arith.subf %62, %61 : vector<1x2x128xf32>
    %cst_21 = arith.constant -2.500000e-01 : f32
    %64 = vector.broadcast %cst_21 : f32 to vector<1x2x128xf32>
    %65 = arith.mulf %64, %63 : vector<1x2x128xf32>
    %cst_22 = arith.constant 1.000000e+00 : f32
    %66 = vector.broadcast %cst_22 : f32 to vector<1x2x128xf32>
    %67 = arith.subf %66, %61 : vector<1x2x128xf32>
    %68 = arith.mulf %65, %67 : vector<1x2x128xf32>
    %69 = math.log %61 : vector<1x2x128xf32>
    %70 = arith.mulf %68, %69 : vector<1x2x128xf32>
    %71 = vector.extract_strided_slice %1 {offsets = [0, 2, 0], sizes = [1, 2, 128], strides = [1, 1, 1]} : vector<1x6x128xf32> to vector<1x2x128xf32>
    %72 = arith.mulf %71, %70 : vector<1x2x128xf32>
    %73 = vector.shape_cast %72 : vector<1x2x128xf32> to vector<1x1x2x128xf32>
    %cst_23 = arith.constant dense<0.000000e+00> : vector<1xf32>
    %74 = vector.multi_reduction <add>, %73, %cst_23 [1, 2, 3] : vector<1x1x2x128xf32> to vector<1xf32>
    %75 = vector.shape_cast %74 : vector<1xf32> to vector<1x1x1x1xf32>
    %76 = vector.extract %75[0, 0, 0, 0] : f32 from vector<1x1x1x1xf32>
    %77 = vector.extract_strided_slice %1 {offsets = [0, 4, 0], sizes = [1, 2, 128], strides = [1, 1, 1]} : vector<1x6x128xf32> to vector<1x2x128xf32>
    %78 = arith.mulf %77, %70 : vector<1x2x128xf32>
    %79 = vector.shape_cast %78 : vector<1x2x128xf32> to vector<1x1x2x128xf32>
    %cst_24 = arith.constant dense<0.000000e+00> : vector<1xf32>
    %80 = vector.multi_reduction <add>, %79, %cst_24 [1, 2, 3] : vector<1x1x2x128xf32> to vector<1xf32>
    %81 = vector.shape_cast %80 : vector<1xf32> to vector<1x1x1x1xf32>
    %82 = vector.extract %81[0, 0, 0, 0] : f32 from vector<1x1x1x1xf32>
    %83 = tpu.iota {dimensions = array<i32: 1>} : vector<1x128xi32>
    %c0_i32 = arith.constant 0 : i32
    %84 = vector.broadcast %c0_i32 : i32 to vector<1x128xi32>
    %85 = arith.cmpi eq, %83, %84 : vector<1x128xi32>
    %cst_25 = arith.constant 0.000000e+00 : f32
    %86 = vector.broadcast %29 : f32 to vector<1x128xf32>
    %87 = vector.broadcast %cst_25 : f32 to vector<1x128xf32>
    %88 = arith.select %85, %86, %87 : vector<1x128xi1>, vector<1x128xf32>
    %c1_i32 = arith.constant 1 : i32
    %89 = vector.broadcast %c1_i32 : i32 to vector<1x128xi32>
    %90 = arith.cmpi eq, %83, %89 : vector<1x128xi32>
    %cst_26 = arith.constant 0.000000e+00 : f32
    %91 = vector.broadcast %76 : f32 to vector<1x128xf32>
    %92 = vector.broadcast %cst_26 : f32 to vector<1x128xf32>
    %93 = arith.select %90, %91, %92 : vector<1x128xi1>, vector<1x128xf32>
    %94 = arith.addf %88, %93 : vector<1x128xf32>
    %c2_i32 = arith.constant 2 : i32
    %95 = vector.broadcast %c2_i32 : i32 to vector<1x128xi32>
    %96 = arith.cmpi eq, %83, %95 : vector<1x128xi32>
    %cst_27 = arith.constant 0.000000e+00 : f32
    %97 = vector.broadcast %82 : f32 to vector<1x128xf32>
    %98 = vector.broadcast %cst_27 : f32 to vector<1x128xf32>
    %99 = arith.select %96, %97, %98 : vector<1x128xi1>, vector<1x128xf32>
    %100 = arith.addf %94, %99 : vector<1x128xf32>
    %c3_i32 = arith.constant 3 : i32
    %101 = vector.broadcast %c3_i32 : i32 to vector<1x128xi32>
    %102 = arith.cmpi eq, %83, %101 : vector<1x128xi32>
    %cst_28 = arith.constant 0.000000e+00 : f32
    %103 = vector.broadcast %46 : f32 to vector<1x128xf32>
    %104 = vector.broadcast %cst_28 : f32 to vector<1x128xf32>
    %105 = arith.select %102, %103, %104 : vector<1x128xi1>, vector<1x128xf32>
    %106 = arith.addf %100, %105 : vector<1x128xf32>
    %c4_i32 = arith.constant 4 : i32
    %107 = vector.broadcast %c4_i32 : i32 to vector<1x128xi32>
    %108 = arith.cmpi eq, %83, %107 : vector<1x128xi32>
    %cst_29 = arith.constant 0.000000e+00 : f32
    %109 = vector.broadcast %51 : f32 to vector<1x128xf32>
    %110 = vector.broadcast %cst_29 : f32 to vector<1x128xf32>
    %111 = arith.select %108, %109, %110 : vector<1x128xi1>, vector<1x128xf32>
    %112 = arith.addf %106, %111 : vector<1x128xf32>
    %c5_i32 = arith.constant 5 : i32
    %113 = vector.broadcast %c5_i32 : i32 to vector<1x128xi32>
    %114 = arith.cmpi eq, %83, %113 : vector<1x128xi32>
    %cst_30 = arith.constant 0.000000e+00 : f32
    %115 = vector.broadcast %56 : f32 to vector<1x128xf32>
    %116 = vector.broadcast %cst_30 : f32 to vector<1x128xf32>
    %117 = arith.select %114, %115, %116 : vector<1x128xi1>, vector<1x128xf32>
    %118 = arith.addf %112, %117 : vector<1x128xf32>
    %c0_31 = arith.constant 0 : index
    %c0_32 = arith.constant 0 : index
    %c0_33 = arith.constant 0 : index
    %119 = vector.load %arg3[%c0_31, %c0_32, %c0_33] : memref<1x1x128xf32, #tpu.memory_space<vmem>>, vector<1x1x128xf32>
    %120 = vector.shape_cast %119 : vector<1x1x128xf32> to vector<1x128xf32>
    %121 = vector.shape_cast %118 : vector<1x128xf32> to vector<1x1x128xf32>
    tpu.vector_store %arg3[%c0_31, %c0_32, %c0_33], %121 {strides = array<i32>} : memref<1x1x128xf32, #tpu.memory_space<vmem>>, vector<1x1x128xf32>,
    return
  }
  func.func @transform_0(%arg0: i32) -> (i32, i32, i32) {
    %c0_i32 = arith.constant 0 : i32
    %c0_i32_0 = arith.constant 0 : i32
    %c0_i32_1 = arith.constant 0 : i32
    return %arg0, %c0_i32, %c0_i32_0 : i32, i32, i32
  }
  func.func @transform_1(%arg0: i32) -> (i32, i32, i32) {
    %c0_i32 = arith.constant 0 : i32
    %c0_i32_0 = arith.constant 0 : i32
    %c0_i32_1 = arith.constant 0 : i32
    return %arg0, %c0_i32, %c0_i32_0 : i32, i32, i32
  }
  func.func @transform_2(%arg0: i32) -> (i32, i32, i32) {
    %c0_i32 = arith.constant 0 : i32
    %c0_i32_0 = arith.constant 0 : i32
    %c0_i32_1 = arith.constant 0 : i32
    return %arg0, %c0_i32, %c0_i32_0 : i32, i32, i32
  }
}

</mosaic_0001>

<llo_original>
// kernel: sub.48
$region0: #{sub.48}
  #allocation0 [shape = 's32[1]{0}', space=sflag, size = 0x4, scoped, tag = 'scoped memory for sub.48']
  %s0 = inlined_call_operand.vmem [shape: f32[2,1,256], index: 0, kind: input, shape index: {}]
  %s1 = inlined_call_operand.vmem [shape: f32[2,1,256], index: 1, kind: input, shape index: {}]
  %s2 = inlined_call_operand.vmem [shape: f32[2,1,256], index: 2, kind: output, shape index: {}]
  %v3 = vld [vmem:[%s0] sm:$0x1]
  %v4 = vld [vmem:[%s1] sm:$0x1]
  %5 = xla_tuple %v3, %v4
  %6 = xla_tuple %5
  %v7 = vsub.f32 %v3, %v4
  %8 = xla_tuple %v7
  %9 = vst [vmem:[%s2] sm:$0x1] %v7
  %s10 = scalar_lea.vmem %s0, 2
  %v11 = vld [vmem:[%s10] sm:$0x1]
  %s12 = scalar_lea.vmem %s1, 2
  %v13 = vld [vmem:[%s12] sm:$0x1]
  %14 = xla_tuple %v11, %v13
  %15 = xla_tuple %14
  %v16 = vsub.f32 %v11, %v13
  %17 = xla_tuple %v16
  %s18 = scalar_lea.vmem %s2, 2
  %19 = vst [vmem:[%s18] sm:$0x1] %v16
  %s20 = scalar_lea.vmem %s0, 1
  %v21 = vld [vmem:[%s20] sm:$0x1]
  %s22 = scalar_lea.vmem %s1, 1
  %v23 = vld [vmem:[%s22] sm:$0x1]
  %24 = xla_tuple %v21, %v23
  %25 = xla_tuple %24
  %v26 = vsub.f32 %v21, %v23
  %27 = xla_tuple %v26
  %s28 = scalar_lea.vmem %s2, 1
  %29 = vst [vmem:[%s28] sm:$0x1] %v26
  %s30 = scalar_lea.vmem %s0, 3
  %v31 = vld [vmem:[%s30] sm:$0x1]
  %s32 = scalar_lea.vmem %s1, 3
  %v33 = vld [vmem:[%s32] sm:$0x1]
  %34 = xla_tuple %v31, %v33
  %35 = xla_tuple %34
  %v36 = vsub.f32 %v31, %v33
  %37 = xla_tuple %v36
  %s38 = scalar_lea.vmem %s2, 3
  %39 = vst [vmem:[%s38] sm:$0x1] %v36

// kernel: matching_loss.1
$region0: #{matching_loss.1}
  #allocation0 [shape = 'u32[]', space=smem, size = 0x4, offset = 0x4, fixed_abs, tag = 'smem constant byte address 0x4 - core index']
  #allocation1 [shape = 'u32[144,128]{1,0:T(1,128)}', space=vmem, size = 0x12000, scoped, tag = 'internal scratch']
  %s0 = inlined_call_operand.vmem [shape: f32[2,7,256], index: 0, kind: input, shape index: {}]
  %s1 = inlined_call_operand.vmem [shape: f32[2,6,128], index: 1, kind: input, shape index: {}]
  %s2 = inlined_call_operand.vmem [shape: f32[2,1,128], index: 2, kind: output, shape index: {}]
  %s3 = sld [smem:[#allocation0]]
  $region41: #{matching_loss.1} parent=0
    _
  %s5 = ssub.s32 1, %s3
  %s6 = scalar_select 0, %s5, %s3
  loop: start=0, step=1, limit=4
  $region2: #{matching_loss.1} parent=0 // loop_pre_header
    _
  $region3: #{matching_loss.1} parent=0 // loop_header
    %s8 = sphi 0, %s12
    %p9 = scmp.ge.s32.totalorder %s8, 4
    %s18 = sphi 0, %s20
    %s21 = sphi 0, %s18
    %s22 = sphi 0, %s21
    %s38 = sphi 0, %s22
    %s44 = sphi 0, %s46
    %s47 = sphi 0, %s44
    %s48 = sphi 0, %s47
    %s64 = sphi 0, %s48
    %s70 = sphi 0, %s72
    %s73 = sphi 0, %s70
    %s74 = sphi 0, %s73
    %s90 = sphi 0, %s74
  $region4: #{matching_loss.1} parent=0 // loop_header_branch
    %11 = sbr.rel (%p9) target = $region8
  $region5: #{matching_loss.1} parent=0 // loop_body
    %s13 = ssub.s32 %s8, 1
    %s14 = ssub.s32 %s8, 2
    %s15 = sadd.s32 %s8, 1
    %s16 = ssub.s32 %s8, %s15
    %p17 = scmp.eq.s32.totalorder %s16, 0
    %s19 = sadd.s32 %s18, 1
    %s20 = scalar_select %p17, %s18, %s19
    %p23 = pneg %p17
    %p24 = scmp.eq.s32.totalorder %s8, 1
    %p25 = por %p23, %p24
    %p26 = scmp.ne.s32.totalorder %s18, %s21
    %p27 = scmp.eq.s32.totalorder %s8, 0
    %p28 = por %p26, %p27
    %p29 = scmp.ne.s32.totalorder %s18, %s21
    %p30 = scmp.eq.s32.totalorder %s13, 1
    %p31 = por %p29, %p30
    %p32 = scmp.ne.s32.totalorder %s21, %s22
    %p33 = scmp.eq.s32.totalorder %s13, 0
    %p34 = por %p32, %p33
    %p35 = scmp.ne.s32.totalorder %s21, %s22
    %p36 = scmp.eq.s32.totalorder %s14, 1
    %p37 = por %p35, %p36
    %p39 = scmp.ne.s32.totalorder %s22, %s38
    %p40 = scmp.eq.s32.totalorder %s14, 0
    %p41 = por %p39, %p40
    %s42 = ssub.s32 %s8, %s15
    %p43 = scmp.eq.s32.totalorder %s42, 0
    %s45 = sadd.s32 %s44, 1
    %s46 = scalar_select %p43, %s44, %s45
    %p49 = pneg %p43
    %p50 = scmp.eq.s32.totalorder %s8, 1
    %p51 = por %p49, %p50
    %p52 = scmp.ne.s32.totalorder %s44, %s47
    %p53 = scmp.eq.s32.totalorder %s8, 0
    %p54 = por %p52, %p53
    %p55 = scmp.ne.s32.totalorder %s44, %s47
    %p56 = scmp.eq.s32.totalorder %s13, 1
    %p57 = por %p55, %p56
    %p58 = scmp.ne.s32.totalorder %s47, %s48
    %p59 = scmp.eq.s32.totalorder %s13, 0
    %p60 = por %p58, %p59
    %p61 = scmp.ne.s32.totalorder %s47, %s48
    %p62 = scmp.eq.s32.totalorder %s14, 1
    %p63 = por %p61, %p62
    %p65 = scmp.ne.s32.totalorder %s48, %s64
    %p66 = scmp.eq.s32.totalorder %s14, 0
    %p67 = por %p65, %p66
    %s68 = ssub.s32 %s8, %s15
    %p69 = scmp.eq.s32.totalorder %s68, 0
    %s71 = sadd.s32 %s70, 1
    %s72 = scalar_select %p69, %s70, %s71
    %p75 = pneg %p69
    %p76 = scmp.eq.s32.totalorder %s8, 1
    %p77 = por %p75, %p76
    %p78 = scmp.ne.s32.totalorder %s70, %s73
    %p79 = scmp.eq.s32.totalorder %s8, 0
    %p80 = por %p78, %p79
    %p81 = scmp.ne.s32.totalorder %s70, %s73
    %p82 = scmp.eq.s32.totalorder %s13, 1
    %p83 = por %p81, %p82
    %p84 = scmp.ne.s32.totalorder %s73, %s74
    %p85 = scmp.eq.s32.totalorder %s13, 0
    %p86 = por %p84, %p85
    %p87 = scmp.ne.s32.totalorder %s73, %s74
    %p88 = scmp.eq.s32.totalorder %s14, 1
    %p89 = por %p87, %p88
    %p91 = scmp.ne.s32.totalorder %s74, %s90
    %p92 = scmp.eq.s32.totalorder %s14, 0
    %p93 = por %p91, %p92
    %p94 = scmp.le.s32.totalorder 1, %s8
    %p95 = scmp.lt.s32.totalorder %s8, 3
    %p96 = pnand %p94, %p95
    %p97 = pneg %p96
    // Predicated region
    $region9: #{matching_loss.1} parent=5 // pred_check
      _
    $region10: #{matching_loss.1} parent=5 // pred_check_branch
      %99 = sbr.rel (%p96) target = $region12
    $region11: #{matching_loss.1} parent=5 // pred_region
      %s100 = ssub.s32 %s8, 1
    $region12: #{matching_loss.1} parent=5 // pred_fallthru
      _
    %p101 = scmp.lt.s32.totalorder %s8, 2
    // Predicated region
    $region13: #{matching_loss.1} parent=5 // pred_check
      %p102 = pneg %p101
    $region14: #{matching_loss.1} parent=5 // pred_check_branch
      %104 = sbr.rel (%p102) target = $region16
    $region15: #{matching_loss.1} parent=5 // pred_region
      // Predicated region
      $region17: #{matching_loss.1} parent=15 // pred_check
        %p105 = pneg %p28
      $region18: #{matching_loss.1} parent=15 // pred_check_branch
        %107 = sbr.rel (%p105) target = $region20
      $region19: #{matching_loss.1} parent=15 // pred_region
        %p108 = scmp.lt.s32.totalorder %s8, 1
        %s109 = scalar_select %p108, %s8, 1
        %s110 = smul.addr %s109, 2
        %s111 = smul.addr %s110, 8
        %s112 = scalar_lea.vmem %s0, %s111
      $region20: #{matching_loss.1} parent=15 // pred_fallthru
        _
      // Predicated region
      $region21: #{matching_loss.1} parent=15 // pred_check
        %p113 = pneg %p54
      $region22: #{matching_loss.1} parent=15 // pred_check_branch
        %115 = sbr.rel (%p113) target = $region24
      $region23: #{matching_loss.1} parent=15 // pred_region
        %p116 = scmp.lt.s32.totalorder %s8, 1
        %s117 = scalar_select %p116, %s8, 1
        %s118 = smul.addr %s117, 8
        %s119 = scalar_lea.vmem %s1, %s118
      $region24: #{matching_loss.1} parent=15 // pred_fallthru
        _
    $region16: #{matching_loss.1} parent=5 // pred_fallthru
      _
    %p120 = scmp.le.s32.totalorder 1, %s8
    %p121 = scmp.lt.s32.totalorder %s8, 3
    %p122 = pnand %p120, %p121
    %p123 = pneg %p122
    // Predicated region
    $region25: #{matching_loss.1} parent=5 // pred_check
      _
    $region26: #{matching_loss.1} parent=5 // pred_check_branch
      %125 = sbr.rel (%p122) target = $region28
    $region27: #{matching_loss.1} parent=5 // pred_region
      %s126 = ssub.s32 %s8, 1
      %p127 = scmp.lt.s32.totalorder %s13, 1
      %s128 = scalar_select %p127, %s13, 1
      %s129 = smul.addr %s128, 2
      %s130 = smul.addr %s129, 8
      %s131 = scalar_lea.vmem %s0, %s130
      %p132 = pneg %p34
      %p133 = pneg %p31
      %p134 = scmp.lt.s32.totalorder %s13, 1
      %s135 = scalar_select %p134, %s13, 1
      %s136 = smul.addr %s135, 8
      %s137 = scalar_lea.vmem %s1, %s136
      %p138 = pneg %p60
      %p139 = pneg %p57
      %p140 = pneg %p86
      %p141 = pneg %p83
      %p142 = scmp.lt.s32.totalorder %s13, 1
      %s143 = scalar_select %p142, %s13, 1
      %s144 = scalar_lea.vmem %s2, %s143
      %p145 = scmp.lt.s32.totalorder %s13, 1
      %s146 = scalar_select %p145, %s13, 1
      %s147 = smul.addr %s146, 2
      %s148 = smul.addr %s147, 8
      %s149 = scalar_lea.vmem %s0, %s148
      %p150 = scmp.lt.s32.totalorder %s13, 1
      %s151 = scalar_select %p150, %s13, 1
      %s152 = smul.addr %s151, 8
      %s153 = scalar_lea.vmem %s1, %s152
      %p154 = scmp.lt.s32.totalorder %s13, 1
      %s155 = scalar_select %p154, %s13, 1
      %s156 = scalar_lea.vmem %s2, %s155
      %v157 = vld [vmem:[%s149] sm:$0x7f]
      %v158 = vld [vmem:[%s149 + $0x8] sm:$0x7f]
      %v159 = vld [vmem:[%s153] sm:$0x3f]
      %v160 = vmax.f32 %v157, 1e-06
      %v161 = vmax.f32 %v158, 1e-06
      %v162 = vmin.f32 %v160, 0.999999
      %v163 = vmin.f32 %v161, 0.999999
      %vm164 = vcmp.eq.f32.partialorder %v157, 1.0
      %vm165 = vcmp.eq.f32.partialorder %v158, 1.0
      %v166 = vsel %vm164, 1, 0
      %v167 = vsel %vm165, 1, 0
      %v168 = vcvt.s32.f32 %v166
      %v169 = vcvt.s32.f32 %v167
      %vm170 = vcmp.ne.f32.partialorder %v157, 0.0
      %vm171 = vcmp.ne.f32.partialorder %v158, 0.0
      %v172 = vsel %vm170, 1, 0
      %v173 = vsel %vm171, 1, 0
      %v174 = vcvt.s32.f32 %v172
      %v175 = vcvt.s32.f32 %v173
      %v176 = vsub.f32 1.0, %v162
      %v177 = vsub.f32 1.0, %v163
      %v178 = vmul.f32 %v176, -0.25
      %v179 = vmul.f32 %v177, -0.25
      %v180 = vmul.f32 %v178, %v176
      %v181 = vmul.f32 %v179, %v177
      %v182 = vlog2.pop %v162
      %v183 = vmul.f32 %v182, 0.6931472
      %v184 = vlog2.pop %v163
      %v185 = vmul.f32 %v184, 0.6931472
      %v186 = vmul.f32 %v180, %v183
      %v187 = vmul.f32 %v181, %v185
      %v190 = vrot.slane %v186, 7
      %v191 = vrot.slane %v187, 7
      %v194 = vmul.f32 %v168, %v190
      %v195 = vmul.f32 %v169, %v191
      %v198 = vrot.slane %v194, 1
      %v199 = vrot.slane %v195, 1
      %vm202 = vcmask 1040384
      %v203 = vsel %vm202, %v198, 0.0
      %v204 = vsel %vm202, %v199, 0.0
      %v205 = vadd.f32 %v203, %v204
      %206 = vadd.xlane.f32.xlu0 %v205
      %v207 = vpop.xlane.xlu0 %206
      %v208 = vrot.slane %v207, 4
      %v209 = vadd.f32 %v207, %v208
      %v210 = vrot.slane %v209, 2
      %v211 = vadd.f32 %v209, %v210
      %v212 = vrot.slane %v211, 1
      %v213 = vadd.f32 %v211, %v212
      %s214 = vtos %v213
      %v215 = vand.u32 2147483647, %v157
      %v216 = vand.u32 2147483647, %v158
      %vm217 = vcmp.lt.f32.partialorder %v215, 1.0
      %vm218 = vcmp.lt.f32.partialorder %v216, 1.0
      %v219 = vmul.f32 %v157, 0.5
      %v220 = vmul.f32 %v158, 0.5
      %v221 = vmul.f32 %v219, %v157
      %v222 = vmul.f32 %v220, %v158
      %v223 = vsub.f32 %v215, 0.5
      %v224 = vsub.f32 %v216, 0.5
      %v225 = vsel %vm217, %v221, %v223
      %v226 = vsel %vm218, %v222, %v224
      %v227 = vlaneseq
      %v228 = vshrl.u32 %v227, 7
      %v229 = vsub.s32 1, %v228
      %v230 = vrot.slane %v174, %v229
      %v231 = vlaneseq
      %v232 = vshrl.u32 %v231, 7
      %v233 = vsub.s32 1, %v232
      %v234 = vrot.slane %v175, %v233
      %v235 = vmul.f32 %v230, %v225
      %v236 = vmul.f32 %v234, %v226
      %v239 = vrot.slane %v235, 2
      %v240 = vrot.slane %v236, 2
      %vm243 = vcmask 1041408
      %v244 = vsel %vm243, %v239, 0.0
      %v245 = vsel %vm243, %v240, 0.0
      %v246 = vadd.f32 %v244, %v245
      %247 = vadd.xlane.f32.xlu0 %v246
      %v248 = vpop.xlane.xlu0 %247
      %v249 = vrot.slane %v248, 4
      %v250 = vadd.f32 %v248, %v249
      %v251 = vrot.slane %v250, 2
      %v252 = vadd.f32 %v250, %v251
      %v253 = vrot.slane %v252, 1
      %v254 = vadd.f32 %v252, %v253
      %s255 = vtos %v254
      %v256 = vrot.slane %v235, 4
      %v257 = vrot.slane %v236, 4
      %v260 = vsel %vm202, %v256, 0.0
      %v261 = vsel %vm202, %v257, 0.0
      %v262 = vadd.f32 %v260, %v261
      %263 = vadd.xlane.f32.xlu0 %v262
      %v264 = vpop.xlane.xlu0 %263
      %v265 = vrot.slane %v264, 4
      %v266 = vadd.f32 %v264, %v265
      %v267 = vrot.slane %v266, 2
      %v268 = vadd.f32 %v266, %v267
      %v269 = vrot.slane %v268, 1
      %v270 = vadd.f32 %v268, %v269
      %s271 = vtos %v270
      %v272 = vrot.slane %v235, 5
      %v273 = vrot.slane %v236, 5
      %v276 = vsel %vm243, %v272, 0.0
      %v277 = vsel %vm243, %v273, 0.0
      %v278 = vadd.f32 %v276, %v277
      %279 = vadd.xlane.f32.xlu0 %v278
      %v280 = vpop.xlane.xlu0 %279
      %v281 = vrot.slane %v280, 4
      %v282 = vadd.f32 %v280, %v281
      %v283 = vrot.slane %v282, 2
      %v284 = vadd.f32 %v282, %v283
      %v285 = vrot.slane %v284, 1
      %v286 = vadd.f32 %v284, %v285
      %s287 = vtos %v286
      %v288 = vmax.f32 %v159, 1e-06
      %v289 = vmin.f32 %v288, 0.999999
      %v290 = vsub.f32 1.0, %v289
      %v291 = vmul.f32 %v290, -0.25
      %v292 = vmul.f32 %v291, %v290
      %v293 = vlog2.pop %v289
      %v294 = vmul.f32 %v293, 0.6931472
      %v295 = vmul.f32 %v292, %v294
      %v297 = vrot.slane %v295, 6
      %v299 = vmul.f32 %v159, %v297
      %v301 = vrot.slane %v299, 2
      %v303 = vsel %vm243, %v301, 0.0
      %304 = vadd.xlane.f32.xlu0 %v303
      %v305 = vpop.xlane.xlu0 %304
      %v306 = vrot.slane %v305, 4
      %v307 = vadd.f32 %v305, %v306
      %v308 = vrot.slane %v307, 2
      %v309 = vadd.f32 %v307, %v308
      %v310 = vrot.slane %v309, 1
      %v311 = vadd.f32 %v309, %v310
      %s312 = vtos %v311
      %v313 = vrot.slane %v295, 4
      %v315 = vmul.f32 %v159, %v313
      %v317 = vrot.slane %v315, 4
      %v319 = vsel %vm243, %v317, 0.0
      %320 = vadd.xlane.f32.xlu0 %v319
      %v321 = vpop.xlane.xlu0 %320
      %v322 = vrot.slane %v321, 4
      %v323 = vadd.f32 %v321, %v322
      %v324 = vrot.slane %v323, 2
      %v325 = vadd.f32 %v323, %v324
      %v326 = vrot.slane %v325, 1
      %v327 = vadd.f32 %v325, %v326
      %s328 = vtos %v327
      %v329 = vlaneseq
      %v330 = vand.u32 %v329, 127
      %vm331 = vcmp.eq.s32.totalorder %v330, 0
      %v332 = vstv %s214
      %v333 = vsel %vm331, %v332, 0.0
      %vm334 = vcmp.eq.s32.totalorder %v330, 1
      %v335 = vstv %s312
      %v336 = vsel %vm334, %v335, 0.0
      %v337 = vadd.f32 %v333, %v336
      %vm338 = vcmp.eq.s32.totalorder %v330, 2
      %v339 = vstv %s328
      %v340 = vsel %vm338, %v339, 0.0
      %v341 = vadd.f32 %v337, %v340
      %vm342 = vcmp.eq.s32.totalorder %v330, 3
      %v343 = vstv %s255
      %v344 = vsel %vm342, %v343, 0.0
      %v345 = vadd.f32 %v341, %v344
      %vm346 = vcmp.eq.s32.totalorder %v330, 4
      %v347 = vstv %s271
      %v348 = vsel %vm346, %v347, 0.0
      %v349 = vadd.f32 %v345, %v348
      %vm350 = vcmp.eq.s32.totalorder %v330, 5
      %v351 = vstv %s287
      %v352 = vsel %vm350, %v351, 0.0
      %v353 = vadd.f32 %v349, %v352
      %354 = vst [vmem:[%s156] sm:$0x1] %v353
      %p355 = scmp.lt.s32.totalorder %s13, 1
      %s356 = scalar_select %p355, %s13, 1
      %s357 = scalar_lea.vmem %s2, %s356
      // Predicated region
      $region29: #{matching_loss.1} parent=27 // pred_check
        %p358 = pneg %p83
      $region30: #{matching_loss.1} parent=27 // pred_check_branch
        %360 = sbr.rel (%p358) target = $region32
      $region31: #{matching_loss.1} parent=27 // pred_region
        _
      $region32: #{matching_loss.1} parent=27 // pred_fallthru
        _
    $region28: #{matching_loss.1} parent=5 // pred_fallthru
      _
    %p361 = scmp.le.s32.totalorder 2, %s8
    // Predicated region
    $region33: #{matching_loss.1} parent=5 // pred_check
      %p362 = pneg %p361
    $region34: #{matching_loss.1} parent=5 // pred_check_branch
      %364 = sbr.rel (%p362) target = $region36
    $region35: #{matching_loss.1} parent=5 // pred_region
      %s365 = ssub.s32 %s8, 2
      // Predicated region
      $region37: #{matching_loss.1} parent=35 // pred_check
        %p366 = pneg %p89
      $region38: #{matching_loss.1} parent=35 // pred_check_branch
        %368 = sbr.rel (%p366) target = $region40
      $region39: #{matching_loss.1} parent=35 // pred_region
        %p369 = scmp.lt.s32.totalorder %s14, 1
        %s370 = scalar_select %p369, %s14, 1
        %s371 = scalar_lea.vmem %s2, %s370
      $region40: #{matching_loss.1} parent=35 // pred_fallthru
        _
    $region36: #{matching_loss.1} parent=5 // pred_fallthru
      _
  $region6: #{matching_loss.1} parent=0 // loop_footer
    %s12 = sadd.s32 1, %s8
  $region7: #{matching_loss.1} parent=0 // loop_footer_branch
    %7 = sbr.rel target = $region3
  $region8: #{matching_loss.1} parent=0 // loop_exit
    _

</llo_original>
